<compile_context>
chip_gen: v6e
topology: v6e:2x2x1
jax: 0.10.0
libtpu: 0.0.40
codegen_flags: <defaults>
</compile_context>

<pallas_src>
import jax
import jax.numpy as jnp
from jax import lax
from jax.experimental import pallas as pl
from jax.experimental.pallas import tpu as pltpu

BN_EPS = 1e-5


# ----------------------------- kernels --------------------------------------

def _stats1_kernel(x_ref, w1_ref, p_ref):
    # x_ref: (C, TL)  w1_ref: (C1, C)  p_ref: (C1, 2)  ->  [sum, sumsq] partials of y1
    y1 = jnp.dot(w1_ref[...], x_ref[...], preferred_element_type=jnp.float32)
    s = jnp.sum(y1, axis=-1, keepdims=True)
    sq = jnp.sum(y1 * y1, axis=-1, keepdims=True)
    p_ref[...] = jnp.concatenate([s, sq], axis=-1)


def _stats2_kernel(x_ref, w1_ref, w2_ref, sc1_ref, sh1_ref, p_ref):
    # Recompute y1, apply folded BN1 + ReLU, y2 = W2 @ h, emit BN2 partials.
    y1 = jnp.dot(w1_ref[...], x_ref[...], preferred_element_type=jnp.float32)
    h = jnp.maximum(y1 * sc1_ref[...] + sh1_ref[...], 0.0)
    y2 = jnp.dot(w2_ref[...], h, preferred_element_type=jnp.float32)
    s = jnp.sum(y2, axis=-1, keepdims=True)
    sq = jnp.sum(y2 * y2, axis=-1, keepdims=True)
    p_ref[...] = jnp.concatenate([s, sq], axis=-1)


def _final_kernel(x_ref, w1_ref, w2_ref, sc1_ref, sh1_ref, sc2_ref, sh2_ref, o_ref):
    # Full forward for one (C, TL) slab: conv1 -> BN1 -> ReLU -> conv2 -> BN2 -> +x -> ReLU.
    x = x_ref[...]
    y1 = jnp.dot(w1_ref[...], x, preferred_element_type=jnp.float32)
    h = jnp.maximum(y1 * sc1_ref[...] + sh1_ref[...], 0.0)
    y2 = jnp.dot(w2_ref[...], h, preferred_element_type=jnp.float32)
    z = y2 * sc2_ref[...] + sh2_ref[...] + x
    o_ref[...] = jnp.maximum(z, 0.0).astype(o_ref.dtype)


# ----------------------------- wrapper ---------------------------------------

def _pick_tile(hw):
    # Largest lane-dense tile that divides H*W; small spatial extents fall back to one tile.
    for t in (512, 256, 128):
        if hw % t == 0:
            return t
    return hw


def _fold_bn(partials, gamma, beta, m):
    # partials: (B, nT, Cc, 2) per-tile [sum, sumsq] -> folded per-channel (scale, shift).
    s = jnp.sum(partials, axis=(0, 1))                        # (Cc, 2), f32
    mean = s[:, 0] / m
    var = jnp.maximum(s[:, 1] / m - mean * mean, 0.0)         # clamp E[y^2]-E[y]^2
    scale = gamma * lax.rsqrt(var + BN_EPS)
    shift = beta - mean * scale
    return scale.reshape(-1, 1), shift.reshape(-1, 1)


def linear2_layer(x, w1, b1, gamma1, beta1, w2, b2, gamma2, beta2):
    """Linear2Layer forward with train-mode BatchNorm2d batch statistics.

    x:  (B, C, H, W) float32
    w1: (C//2, C, 1, 1), b1: (C//2,)   net1 Conv2d(k=1)  [bias cancelled by BN1 mean-sub]
    gamma1/beta1: (C//2,)              net1 BatchNorm2d affine
    w2: (C, C//2, 1, 1), b2: (C,)      net2 Conv2d(k=1)  [bias cancelled by BN2 mean-sub]
    gamma2/beta2: (C,)                 net2 BatchNorm2d affine
    Returns (B, C, H, W) float32.
    """
    del b1, b2  # mathematically exact: train-mode BN subtracts the per-channel mean

    B, C, H, W = x.shape
    C1 = w1.shape[0]
    HW = H * W
    M = B * HW
    tl = _pick_tile(HW)
    nt = HW // tl
    grid = (B, nt)

    x3 = x.reshape(B, C, HW).astype(jnp.float32)    # free reshape (no data movement)
    w1m = w1.reshape(C1, C).astype(jnp.float32)
    w2m = w2.reshape(C, C1).astype(jnp.float32)

    x_spec = pl.BlockSpec((None, C, tl), lambda b, t: (b, 0, t))
    w1_spec = pl.BlockSpec((C1, C), lambda b, t: (0, 0))
    w2_spec = pl.BlockSpec((C, C1), lambda b, t: (0, 0))

    def vec_spec(c):  # tiny per-channel vectors, fetched once (constant block index)
        return pl.BlockSpec((c, 1), lambda b, t: (0, 0))

    par = pltpu.CompilerParams(dimension_semantics=("parallel", "parallel"))

    # ---- pass 1: BN1 batch statistics ---------------------------------------
    p1 = pl.pallas_call(
        _stats1_kernel,
        out_shape=jax.ShapeDtypeStruct((B, nt, C1, 2), jnp.float32),
        grid=grid,
        in_specs=[x_spec, w1_spec],
        out_specs=pl.BlockSpec((None, None, C1, 2), lambda b, t: (b, t, 0, 0)),
        compiler_params=par,
        cost_estimate=pl.CostEstimate(
            flops=2 * M * C * C1 + 3 * M * C1,
            transcendentals=0,
            bytes_accessed=4 * (M * C + C1 * C + B * nt * C1 * 2)),
    )(x3, w1m)

    sc1, sh1 = _fold_bn(p1, gamma1, beta1, M)       # (C1, 1), (C1, 1)

    # ---- pass 2: BN2 batch statistics ---------------------------------------
    p2 = pl.pallas_call(
        _stats2_kernel,
        out_shape=jax.ShapeDtypeStruct((B, nt, C, 2), jnp.float32),
        grid=grid,
        in_specs=[x_spec, w1_spec, w2_spec, vec_spec(C1), vec_spec(C1)],
        out_specs=pl.BlockSpec((None, None, C, 2), lambda b, t: (b, t, 0, 0)),
        compiler_params=par,
        cost_estimate=pl.CostEstimate(
            flops=4 * M * C * C1 + 3 * M * C1 + 3 * M * C,
            transcendentals=0,
            bytes_accessed=4 * (M * C + 2 * C1 * C + 2 * C1 + B * nt * C * 2)),
    )(x3, w1m, w2m, sc1, sh1)

    sc2, sh2 = _fold_bn(p2, gamma2, beta2, M)       # (C, 1), (C, 1)

    # ---- pass 3: full forward + residual + ReLU ------------------------------
    out3 = pl.pallas_call(
        _final_kernel,
        out_shape=jax.ShapeDtypeStruct((B, C, HW), jnp.float32),
        grid=grid,
        in_specs=[x_spec, w1_spec, w2_spec,
                  vec_spec(C1), vec_spec(C1), vec_spec(C), vec_spec(C)],
        out_specs=pl.BlockSpec((None, C, tl), lambda b, t: (b, 0, t)),
        compiler_params=par,
        cost_estimate=pl.CostEstimate(
            flops=4 * M * C * C1 + 3 * M * C1 + 5 * M * C,
            transcendentals=0,
            bytes_accessed=4 * (2 * M * C + 2 * C1 * C + 2 * C1 + 2 * C)),
    )(x3, w1m, w2m, sc1, sh1, sc2, sh2)

    return out3.reshape(B, C, H, W)


# ----------------------------- reference -------------------------------------

def _reference(x, w1, b1, g1, be1, w2, b2, g2, be2):
    C = x.shape[1]
    C1 = w1.shape[0]
    w1m = w1.reshape(C1, C)
    w2m = w2.reshape(C, C1)
    y1 = jnp.einsum("oc,bchw->bohw", w1m, x) + b1[None, :, None, None]
    m1 = jnp.mean(y1, axis=(0, 2, 3), keepdims=True)
    v1 = jnp.mean((y1 - m1) ** 2, axis=(0, 2, 3), keepdims=True)
    h = jnp.maximum(g1[None, :, None, None] * (y1 - m1) / jnp.sqrt(v1 + BN_EPS)
                    + be1[None, :, None, None], 0.0)
    y2 = jnp.einsum("oc,bchw->bohw", w2m, h) + b2[None, :, None, None]
    m2 = jnp.mean(y2, axis=(0, 2, 3), keepdims=True)
    v2 = jnp.mean((y2 - m2) ** 2, axis=(0, 2, 3), keepdims=True)
    z = (g2[None, :, None, None] * (y2 - m2) / jnp.sqrt(v2 + BN_EPS)
         + be2[None, :, None, None])
    return jnp.maximum(z + x, 0.0)


if __name__ == "__main__":
    B, C, H, W = 2, 16, 32, 32          # in_channels=16 -> hidden C//2=8; H*W=1024 (2 tiles of 512)
    C1 = C // 2

    key = jax.random.PRNGKey(0)
    kx, kw1, kb1, kw2, kb2, kg1, kbe1, kg2, kbe2 = jax.random.split(key, 9)

    x = jax.random.normal(kx, (B, C, H, W), dtype=jnp.float32)

    bound1 = 1.0 / jnp.sqrt(jnp.float32(C))       # Conv2d(k=1) kaiming-uniform-style bound
    w1 = jax.random.uniform(kw1, (C1, C, 1, 1), jnp.float32, -bound1, bound1)
    b1 = jax.random.uniform(kb1, (C1,), jnp.float32, -bound1, bound1)
    bound2 = 1.0 / jnp.sqrt(jnp.float32(C1))
    w2 = jax.random.uniform(kw2, (C, C1, 1, 1), jnp.float32, -bound2, bound2)
    b2 = jax.random.uniform(kb2, (C,), jnp.float32, -bound2, bound2)
    # Slightly perturbed BN affines to exercise the folded scale/shift path.
    gamma1 = 1.0 + 0.1 * jax.random.normal(kg1, (C1,), jnp.float32)
    beta1 = 0.1 * jax.random.normal(kbe1, (C1,), jnp.float32)
    gamma2 = 1.0 + 0.1 * jax.random.normal(kg2, (C,), jnp.float32)
    beta2 = 0.1 * jax.random.normal(kbe2, (C,), jnp.float32)

    out = jax.block_until_ready(
        linear2_layer(x, w1, b1, gamma1, beta1, w2, b2, gamma2, beta2))

    ref = _reference(x, w1, b1, gamma1, beta1, w2, b2, gamma2, beta2)
    assert out.shape == (B, C, H, W)
    assert jnp.allclose(out, ref, atol=1e-3, rtol=1e-3), float(jnp.max(jnp.abs(out - ref)))

    print("KERNEL_OK")
</pallas_src>

<mosaic_0001>
module attributes {stable_mosaic.version = 11 : i64} {
  func.func @_stats1_kernel(%arg0: i32, %arg1: i32, %arg2: memref<1x16x512xf32, #tpu.memory_space<vmem>>, %arg3: memref<8x16xf32, #tpu.memory_space<vmem>>, %arg4: memref<1x1x8x2xf32, #tpu.memory_space<vmem>>) attributes {dimension_semantics = [#tpu.dimension_semantics<parallel>, #tpu.dimension_semantics<parallel>], iteration_bounds = array<i64: 2, 2>, scalar_prefetch = 0 : i64, scratch_operands = 0 : i64, tpu.core_type = #tpu.core_type<tc>, window_params = [{transform_indices = @transform_0, window_bounds = array<i64: 1, 16, 512>}, {pipeline_mode = #tpu.pipeline_mode<synchronous>, transform_indices = @transform_1, window_bounds = array<i64: 8, 16>}, {transform_indices = @transform_2, window_bounds = array<i64: 1, 1, 8, 2>}]} {
    %c0 = arith.constant 0 : index
    %c0_0 = arith.constant 0 : index
    %0 = vector.load %arg3[%c0, %c0_0] : memref<8x16xf32, #tpu.memory_space<vmem>>, vector<8x16xf32>
    %c0_1 = arith.constant 0 : index
    %c0_2 = arith.constant 0 : index
    %c0_3 = arith.constant 0 : index
    %1 = vector.load %arg2[%c0_1, %c0_2, %c0_3] : memref<1x16x512xf32, #tpu.memory_space<vmem>>, vector<1x16x512xf32>
    %2 = vector.shape_cast %1 : vector<1x16x512xf32> to vector<16x512xf32>
    %cst = arith.constant dense<0.000000e+00> : vector<8x512xf32>
    %3 = tpu.matmul %0, %2, %cst {dimension_numbers = #tpu.dot_dimension_numbers<[1], [0], [0], [1], [0, 0, 1, 1], [], []>} : vector<8x16xf32>, vector<16x512xf32>, vector<8x512xf32> -> vector<8x512xf32>
    %cst_4 = arith.constant dense<0.000000e+00> : vector<8xf32>
    %4 = vector.multi_reduction <add>, %3, %cst_4 [1] : vector<8x512xf32> to vector<8xf32>
    %5 = vector.shape_cast %4 : vector<8xf32> to vector<8x1xf32>
    %6 = arith.mulf %3, %3 : vector<8x512xf32>
    %cst_5 = arith.constant dense<0.000000e+00> : vector<8xf32>
    %7 = vector.multi_reduction <add>, %6, %cst_5 [1] : vector<8x512xf32> to vector<8xf32>
    %8 = vector.shape_cast %7 : vector<8xf32> to vector<8x1xf32>
    %9 = tpu.concatenate %5, %8 in 1 : vector<8x1xf32>, vector<8x1xf32> -> vector<8x2xf32>
    %c0_6 = arith.constant 0 : index
    %c0_7 = arith.constant 0 : index
    %c0_8 = arith.constant 0 : index
    %c0_9 = arith.constant 0 : index
    %10 = vector.load %arg4[%c0_6, %c0_7, %c0_8, %c0_9] : memref<1x1x8x2xf32, #tpu.memory_space<vmem>>, vector<1x1x8x2xf32>
    %11 = vector.shape_cast %10 : vector<1x1x8x2xf32> to vector<8x2xf32>
    %12 = vector.shape_cast %9 : vector<8x2xf32> to vector<1x1x8x2xf32>
    tpu.vector_store %arg4[%c0_6, %c0_7, %c0_8, %c0_9], %12 {strides = array<i32>} : memref<1x1x8x2xf32, #tpu.memory_space<vmem>>, vector<1x1x8x2xf32>,
    return
  }
  func.func @transform_0(%arg0: i32, %arg1: i32) -> (i32, i32, i32) {
    %c0_i32 = arith.constant 0 : i32
    %c0_i32_0 = arith.constant 0 : i32
    return %arg0, %c0_i32, %arg1 : i32, i32, i32
  }
  func.func @transform_1(%arg0: i32, %arg1: i32) -> (i32, i32) {
    %c0_i32 = arith.constant 0 : i32
    %c0_i32_0 = arith.constant 0 : i32
    %c0_i32_1 = arith.constant 0 : i32
    return %c0_i32, %c0_i32_0 : i32, i32
  }
  func.func @transform_2(%arg0: i32, %arg1: i32) -> (i32, i32, i32, i32) {
    %c0_i32 = arith.constant 0 : i32
    %c0_i32_0 = arith.constant 0 : i32
    %c0_i32_1 = arith.constant 0 : i32
    return %arg0, %arg1, %c0_i32, %c0_i32_0 : i32, i32, i32, i32
  }
}

</mosaic_0001>

<llo_original>
// kernel: tpu_custom_call.1
$region0: #{tpu_custom_call.1}
  #allocation0 [shape = 'u32[]', space=smem, size = 0x4, offset = 0x4, fixed_abs, tag = 'smem constant byte address 0x4 - core index']
  #allocation1 [shape = 'u32[144,128]{1,0:T(1,128)}', space=vmem, size = 0x12000, scoped, tag = 'internal scratch']
  %s0 = inlined_call_operand.hbm [shape: f32[2,16,1024], index: 0, kind: input, shape index: {}]
  %s1 = inlined_call_operand.hbm [shape: f32[8,16], index: 1, kind: input, shape index: {}]
  %s2 = inlined_call_operand.vmem [shape: f32[2,2,8,2], index: 2, kind: output, shape index: {}]
  %s3 = sld [smem:[#allocation0]]
  $region49: #{tpu_custom_call.1} parent=0
    _
  %s5 = ssub.s32 1, %s3
  %s6 = scalar_select 0, %s5, %s3
  $region1: #{tpu_custom_call.1} parent=0
    #allocation2 [shape = 'u8[65536]{0}', space=vmem, size = 0x10000, scoped, tag = 'input window, operand 0']
    #allocation3 [shape = 's32[2]{0}', space=sflag, size = 0x8, scoped, tag = 'scoped memory for tpu_custom_call.1']
    #allocation4 [shape = 'u8[4096]{0}', space=vmem, size = 0x1000, scoped, tag = 'input window, operand 1, single buffered']
    #allocation5 [shape = 's32[1]{0}', space=sflag, size = 0x4, scoped, tag = 'scoped memory for tpu_custom_call.1']
    %7 = vsyncpa [#allocation3], 0
    %s8 = scalar_lea.sflag [#allocation3], 1
    %9 = vsyncpa %s8, 0
    %10 = vsyncpa [#allocation5], 0
    loop: start=0, step=1, limit=6
    $region2: #{tpu_custom_call.1} parent=1 // loop_pre_header
      _
    $region3: #{tpu_custom_call.1} parent=1 // loop_header
      %s12 = sphi 0, %s16
      %p13 = scmp.ge.s32.totalorder %s12, 6
      %s19 = sphi 0, %s31
      %s20 = sphi 0, %s27
      %s21 = sphi 0, %s19
      %s22 = sphi 0, %s20
      %s23 = sphi 0, %s21
      %s24 = sphi 0, %s22
      %s36 = sphi 0, %s38
      %s39 = sphi 0, %s36
      %s40 = sphi 0, %s39
      %s56 = sphi 0, %s40
      %s60 = sphi 0, %s60
      %s62 = sphi 0, %s60
      %s63 = sphi 0, %s62
      %s77 = sphi 0, %s63
      %s85 = sphi 0, %s87
      %s88 = sphi 0, %s85
      %s89 = sphi 0, %s88
      %s105 = sphi 0, %s89
    $region4: #{tpu_custom_call.1} parent=1 // loop_header_branch
      %15 = sbr.rel (%p13) target = $region8
    $region5: #{tpu_custom_call.1} parent=1 // loop_body
      %s17 = ssub.s32 %s12, 1
      %s18 = ssub.s32 %s12, 2
      %s25 = sadd.s32 1, %s20
      %p26 = scmp.ge.s32.totalorder %s25, 2
      %s27 = scalar_select %p26, 0, %s25
      %s28 = sadd.s32 1, %s19
      %s29 = scalar_select %p26, %s28, %s19
      %p30 = scmp.ge.s32.totalorder %s29, 2
      %s31 = scalar_select %p30, 0, %s29
      %s32 = ssub.s32 %s19, %s31
      %s33 = ssub.s32 %s20, %s27
      %s34 = sor.u32 %s32, %s33
      %p35 = scmp.eq.s32.totalorder %s34, 0
      %s37 = sadd.s32 %s36, 1
      %s38 = scalar_select %p35, %s36, %s37
      %p41 = pneg %p35
      %p42 = scmp.eq.s32.totalorder %s12, 3
      %p43 = por %p41, %p42
      %p44 = scmp.ne.s32.totalorder %s36, %s39
      %p45 = scmp.eq.s32.totalorder %s12, 0
      %p46 = por %p44, %p45
      %p47 = scmp.ne.s32.totalorder %s36, %s39
      %p48 = scmp.eq.s32.totalorder %s17, 3
      %p49 = por %p47, %p48
      %p50 = scmp.ne.s32.totalorder %s39, %s40
      %p51 = scmp.eq.s32.totalorder %s17, 0
      %p52 = por %p50, %p51
      %p53 = scmp.ne.s32.totalorder %s39, %s40
      %p54 = scmp.eq.s32.totalorder %s18, 3
      %p55 = por %p53, %p54
      %p57 = scmp.ne.s32.totalorder %s40, %s56
      %p58 = scmp.eq.s32.totalorder %s18, 0
      %p59 = por %p57, %p58
      %s61 = sadd.s32 %s60, 1
      %p64 = scmp.eq.s32.totalorder %s12, 3
      %p65 = scmp.ne.s32.totalorder %s60, %s62
      %p66 = scmp.eq.s32.totalorder %s12, 0
      %p67 = por %p65, %p66
      %p68 = scmp.ne.s32.totalorder %s60, %s62
      %p69 = scmp.eq.s32.totalorder %s17, 3
      %p70 = por %p68, %p69
      %p71 = scmp.ne.s32.totalorder %s62, %s63
      %p72 = scmp.eq.s32.totalorder %s17, 0
      %p73 = por %p71, %p72
      %p74 = scmp.ne.s32.totalorder %s62, %s63
      %p75 = scmp.eq.s32.totalorder %s18, 3
      %p76 = por %p74, %p75
      %p78 = scmp.ne.s32.totalorder %s63, %s77
      %p79 = scmp.eq.s32.totalorder %s18, 0
      %p80 = por %p78, %p79
      %s81 = ssub.s32 %s19, %s31
      %s82 = ssub.s32 %s20, %s27
      %s83 = sor.u32 %s81, %s82
      %p84 = scmp.eq.s32.totalorder %s83, 0
      %s86 = sadd.s32 %s85, 1
      %s87 = scalar_select %p84, %s85, %s86
      %p90 = pneg %p84
      %p91 = scmp.eq.s32.totalorder %s12, 3
      %p92 = por %p90, %p91
      %p93 = scmp.ne.s32.totalorder %s85, %s88
      %p94 = scmp.eq.s32.totalorder %s12, 0
      %p95 = por %p93, %p94
      %p96 = scmp.ne.s32.totalorder %s85, %s88
      %p97 = scmp.eq.s32.totalorder %s17, 3
      %p98 = por %p96, %p97
      %p99 = scmp.ne.s32.totalorder %s88, %s89
      %p100 = scmp.eq.s32.totalorder %s17, 0
      %p101 = por %p99, %p100
      %p102 = scmp.ne.s32.totalorder %s88, %s89
      %p103 = scmp.eq.s32.totalorder %s18, 3
      %p104 = por %p102, %p103
      %p106 = scmp.ne.s32.totalorder %s89, %s105
      %p107 = scmp.eq.s32.totalorder %s18, 0
      %p108 = por %p106, %p107
      %p109 = scmp.le.s32.totalorder 1, %s12
      %p110 = scmp.lt.s32.totalorder %s12, 5
      %p111 = pnand %p109, %p110
      %p112 = pneg %p111
      // Predicated region
      $region9: #{tpu_custom_call.1} parent=5 // pred_check
        _
      $region10: #{tpu_custom_call.1} parent=5 // pred_check_branch
        %114 = sbr.rel (%p111) target = $region12
      $region11: #{tpu_custom_call.1} parent=5 // pred_region
        %s115 = ssub.s32 %s12, 1
        // Predicated region
        $region13: #{tpu_custom_call.1} parent=11 // pred_check
          %p116 = pneg %p73
        $region14: #{tpu_custom_call.1} parent=11 // pred_check_branch
          %118 = sbr.rel (%p116) target = $region16
        $region15: #{tpu_custom_call.1} parent=11 // pred_region
          %s120 = ssub.s32 128, 128
          %121 = vsyncadd [#allocation5], %s120
          %s123 = sshll.u32 [#allocation4], 4
          %s124 = int_to_ptr.vmem [resolvable:$true] %s123
          %126 = dma.hbm_to_vmem [thread:$0]  %s1, 128, %s124, [#allocation5]
        $region16: #{tpu_custom_call.1} parent=11 // pred_fallthru
          _
      $region12: #{tpu_custom_call.1} parent=5 // pred_fallthru
        _
      %p127 = scmp.lt.s32.totalorder %s12, 4
      // Predicated region
      $region17: #{tpu_custom_call.1} parent=5 // pred_check
        %p128 = pneg %p127
      $region18: #{tpu_custom_call.1} parent=5 // pred_check_branch
        %130 = sbr.rel (%p128) target = $region20
      $region19: #{tpu_custom_call.1} parent=5 // pred_region
        // Predicated region
        $region21: #{tpu_custom_call.1} parent=19 // pred_check
          %p131 = pneg %p46
        $region22: #{tpu_custom_call.1} parent=19 // pred_check_branch
          %133 = sbr.rel (%p131) target = $region24
        $region23: #{tpu_custom_call.1} parent=19 // pred_region
          %s134 = sand.u32 %s36, 1
          %s135 = scalar_lea.sflag [#allocation3], %s134
          %s136 = sand.u32 %s36, 1
          %s137 = smul.addr %s136, 64
          %s138 = scalar_lea.vmem [#allocation2], %s137
          %s139 = smul.u32 4, %s20
          %s141 = ssub.s32 1024, 1024
          %142 = vsyncadd %s135, %s141
          %s143 = smul.addr %s19, 16
          %s144 = sadd.s32 %s139, %s143
          %s145 = smul.addr %s144, 128
          %s146 = scalar_lea.hbm %s0, %s145
          %s147 = sshll.u32 %s138, 4
          %s148 = int_to_ptr.vmem [resolvable:$true] %s147
          %153 = dma.hbm_to_vmem [thread:$0]  %s146, 1024, %s148, %s135, 1024, 512, 32
        $region24: #{tpu_custom_call.1} parent=19 // pred_fallthru
          _
      $region20: #{tpu_custom_call.1} parent=5 // pred_fallthru
        _
      %p154 = scmp.le.s32.totalorder 1, %s12
      %p155 = scmp.lt.s32.totalorder %s12, 5
      %p156 = pnand %p154, %p155
      %p157 = pneg %p156
      // Predicated region
      $region25: #{tpu_custom_call.1} parent=5 // pred_check
        _
      $region26: #{tpu_custom_call.1} parent=5 // pred_check_branch
        %159 = sbr.rel (%p156) target = $region28
      $region27: #{tpu_custom_call.1} parent=5 // pred_region
        %s160 = ssub.s32 %s12, 1
        %s161 = sand.u32 %s39, 1
        %s162 = scalar_lea.sflag [#allocation3], %s161
        %s163 = sand.u32 %s39, 1
        %s164 = smul.addr %s163, 64
        %s165 = scalar_lea.vmem [#allocation2], %s164
        // Predicated region
        $region29: #{tpu_custom_call.1} parent=27 // pred_check
          %p166 = pneg %p52
        $region30: #{tpu_custom_call.1} parent=27 // pred_check_branch
          %168 = sbr.rel (%p166) target = $region32
        $region31: #{tpu_custom_call.1} parent=27 // pred_region
          %169 = dma.done %s162, 1024
        $region32: #{tpu_custom_call.1} parent=27 // pred_fallthru
          _
        // Predicated region
        $region33: #{tpu_custom_call.1} parent=27 // pred_check
          %p170 = pneg %p73
        $region34: #{tpu_custom_call.1} parent=27 // pred_check_branch
          %172 = sbr.rel (%p170) target = $region36
        $region35: #{tpu_custom_call.1} parent=27 // pred_region
          %173 = dma.done [#allocation5], 128
        $region36: #{tpu_custom_call.1} parent=27 // pred_fallthru
          _
        %s174 = sand.u32 %s39, 1
        %s175 = scalar_lea.sflag [#allocation3], %s174
        %s176 = sand.u32 %s39, 1
        %s177 = smul.addr %s176, 64
        %s178 = scalar_lea.vmem [#allocation2], %s177
        %p179 = pneg %p52
        %p180 = pneg %p49
        %p181 = pneg %p73
        %p182 = pneg %p70
        %p183 = pneg %p101
        %p184 = pneg %p98
        %p185 = scmp.lt.s32.totalorder %s21, 1
        %s186 = scalar_select %p185, %s21, 1
        %p187 = scmp.lt.s32.totalorder %s22, 1
        %s188 = scalar_select %p187, %s22, 1
        %s189 = smul.addr %s186, 2
        %s190 = sadd.s32 %s188, %s189
        %s191 = smul.addr %s190, 8
        %s192 = scalar_lea.vmem %s2, %s191
        %s193 = smul.u32 4, %s22
        %p194 = scmp.lt.s32.totalorder %s21, 1
        %s195 = scalar_select %p194, %s21, 1
        %p196 = scmp.lt.s32.totalorder %s22, 1
        %s197 = scalar_select %p196, %s22, 1
        %s198 = smul.addr %s195, 2
        %s199 = sadd.s32 %s197, %s198
        %s200 = smul.addr %s199, 8
        %s201 = scalar_lea.vmem %s2, %s200
        %v202 = vld [vmem:[#allocation4] sm:$0xff]
        %v203 = vld [vmem:[%s165] sm:$0xff]
        %v204 = vld [vmem:[%s165 + $0x8] sm:$0xff]
        %v205 = vld [vmem:[%s165 + $0x10] sm:$0xff]
        %v206 = vld [vmem:[%s165 + $0x18] sm:$0xff]
        %v207 = vld [vmem:[%s165 + $0x20] sm:$0xff]
        %v208 = vld [vmem:[%s165 + $0x28] sm:$0xff]
        %v209 = vld [vmem:[%s165 + $0x30] sm:$0xff]
        %v210 = vld [vmem:[%s165 + $0x38] sm:$0xff]
        %vm211 = vcmask 130048
        %v213 = vsel %vm211, %v202, 0
        %215 = vmatprep.subr.mxu0 0.0
        %216 = vmatpush1.msra.mxu0 0.0
        %217 = vmatprep.subr.mxu0 0.0
        %218 = vmatpush1.msra.mxu0 0.0
        %219 = vmatprep.subr.mxu0 0.0
        %220 = vmatpush1.msra.mxu0 0.0
        %221 = vmatprep.subr.mxu0 0.0
        %222 = vmatpush1.msra.mxu0 0.0
        %223 = vmatprep.subr.mxu0 0.0
        %224 = vmatpush1.msra.mxu0 0.0
        %225 = vmatprep.subr.mxu0 0.0
        %226 = vmatpush1.msra.mxu0 0.0
        %227 = vmatprep.subr.mxu0 0.0
        %228 = vmatpush1.msra.mxu0 0.0
        %229 = vmatprep.subr.mxu0 0.0
        %230 = vmatpush1.msra.mxu0 0.0
        %231 = vmatprep.subr.mxu0 0.0
        %232 = vmatpush1.msra.mxu0 0.0
        %233 = vmatprep.subr.mxu0 0.0
        %234 = vmatpush1.msra.mxu0 0.0
        %235 = vmatprep.subr.mxu0 0.0
        %236 = vmatpush1.msra.mxu0 0.0
        %237 = vmatprep.subr.mxu0 0.0
        %238 = vmatpush1.msra.mxu0 0.0
        %239 = vmatprep.subr.mxu0 0.0
        %240 = vmatpush1.msra.mxu0 0.0
        %241 = vmatprep.subr.mxu0 0.0
        %242 = vmatpush1.msra.mxu0 0.0
        %243 = vmatprep.subr.mxu0 %v208
        %244 = vmatpush1.msra.mxu0 %v207
        %245 = vmatprep.subr.mxu0 %v204
        %246 = vmatpush1.msra.mxu0 %v203
        %247 = vmatprep.subr.mxu0 0.0
        %248 = vmatpush2.msra.mxu0 0.0
        %249 = vmatprep.subr.mxu0 0.0
        %250 = vmatpush2.msra.mxu0 0.0
        %251 = vmatprep.subr.mxu0 0.0
        %252 = vmatpush2.msra.mxu0 0.0
        %253 = vmatprep.subr.mxu0 0.0
        %254 = vmatpush2.msra.mxu0 0.0
        %255 = vmatprep.subr.mxu0 0.0
        %256 = vmatpush2.msra.mxu0 0.0
        %257 = vmatprep.subr.mxu0 0.0
        %258 = vmatpush2.msra.mxu0 0.0
        %259 = vmatprep.subr.mxu0 0.0
        %260 = vmatpush2.msra.mxu0 0.0
        %261 = vmatprep.subr.mxu0 0.0
        %262 = vmatpush2.msra.mxu0 0.0
        %263 = vmatprep.subr.mxu0 0.0
        %264 = vmatpush2.msra.mxu0 0.0
        %265 = vmatprep.subr.mxu0 0.0
        %266 = vmatpush2.msra.mxu0 0.0
        %267 = vmatprep.subr.mxu0 0.0
        %268 = vmatpush2.msra.mxu0 0.0
        %269 = vmatprep.subr.mxu0 0.0
        %270 = vmatpush2.msra.mxu0 0.0
        %271 = vmatprep.subr.mxu0 0.0
        %272 = vmatpush2.msra.mxu0 0.0
        %273 = vmatprep.subr.mxu0 0.0
        %274 = vmatpush2.msra.mxu0 0.0
        %275 = vmatprep.subr.mxu0 0.0
        %276 = vmatpush2.msra.mxu0 0.0
        %277 = vmatprep.subr.mxu0 0.0
        %278 = vmatpush2.msra.mxu0 0.0
        %279 = vmatprep.mubr.f32.mxu0 0.0
        %280 = vmatmul.mubr.f32.gmra.mxu0 %v213
        %v281 = vpop.f32.mrf.mxu0
        %v282 = vadd.f32 0.0, %v281
        %v283 = vpop.f32.mrf.mxu0
        %v284 = vadd.f32 0.0, %v283
        %285 = vdwg.mxu0
        %286 = vmatprep.subr.mxu0 0.0
        %287 = vmatpush1.msra.mxu0 0.0
        %288 = vmatprep.subr.mxu0 0.0
        %289 = vmatpush1.msra.mxu0 0.0
        %290 = vmatprep.subr.mxu0 0.0
        %291 = vmatpush1.msra.mxu0 0.0
        %292 = vmatprep.subr.mxu0 0.0
        %293 = vmatpush1.msra.mxu0 0.0
        %294 = vmatprep.subr.mxu0 0.0
        %295 = vmatpush1.msra.mxu0 0.0
        %296 = vmatprep.subr.mxu0 0.0
        %297 = vmatpush1.msra.mxu0 0.0
        %298 = vmatprep.subr.mxu0 0.0
        %299 = vmatpush1.msra.mxu0 0.0
        %300 = vmatprep.subr.mxu0 0.0
        %301 = vmatpush1.msra.mxu0 0.0
        %302 = vmatprep.subr.mxu0 0.0
        %303 = vmatpush1.msra.mxu0 0.0
        %304 = vmatprep.subr.mxu0 0.0
        %305 = vmatpush1.msra.mxu0 0.0
        %306 = vmatprep.subr.mxu0 0.0
        %307 = vmatpush1.msra.mxu0 0.0
        %308 = vmatprep.subr.mxu0 0.0
        %309 = vmatpush1.msra.mxu0 0.0
        %310 = vmatprep.subr.mxu0 0.0
        %311 = vmatpush1.msra.mxu0 0.0
        %312 = vmatprep.subr.mxu0 0.0
        %313 = vmatpush1.msra.mxu0 0.0
        %314 = vmatprep.subr.mxu0 %v210
        %315 = vmatpush1.msra.mxu0 %v209
        %316 = vmatprep.subr.mxu0 %v206
        %317 = vmatpush1.msra.mxu0 %v205
        %318 = vmatprep.subr.mxu0 0.0
        %319 = vmatpush2.msra.mxu0 0.0
        %320 = vmatprep.subr.mxu0 0.0
        %321 = vmatpush2.msra.mxu0 0.0
        %322 = vmatprep.subr.mxu0 0.0
        %323 = vmatpush2.msra.mxu0 0.0
        %324 = vmatprep.subr.mxu0 0.0
        %325 = vmatpush2.msra.mxu0 0.0
        %326 = vmatprep.subr.mxu0 0.0
        %327 = vmatpush2.msra.mxu0 0.0
        %328 = vmatprep.subr.mxu0 0.0
        %329 = vmatpush2.msra.mxu0 0.0
        %330 = vmatprep.subr.mxu0 0.0
        %331 = vmatpush2.msra.mxu0 0.0
        %332 = vmatprep.subr.mxu0 0.0
        %333 = vmatpush2.msra.mxu0 0.0
        %334 = vmatprep.subr.mxu0 0.0
        %335 = vmatpush2.msra.mxu0 0.0
        %336 = vmatprep.subr.mxu0 0.0
        %337 = vmatpush2.msra.mxu0 0.0
        %338 = vmatprep.subr.mxu0 0.0
        %339 = vmatpush2.msra.mxu0 0.0
        %340 = vmatprep.subr.mxu0 0.0
        %341 = vmatpush2.msra.mxu0 0.0
        %342 = vmatprep.subr.mxu0 0.0
        %343 = vmatpush2.msra.mxu0 0.0
        %344 = vmatprep.subr.mxu0 0.0
        %345 = vmatpush2.msra.mxu0 0.0
        %346 = vmatprep.subr.mxu0 0.0
        %347 = vmatpush2.msra.mxu0 0.0
        %348 = vmatprep.subr.mxu0 0.0
        %349 = vmatpush2.msra.mxu0 0.0
        %350 = vmatprep.mubr.f32.mxu0 0.0
        %351 = vmatmul.mubr.f32.gmra.mxu0 %v213
        %v352 = vpop.f32.mrf.mxu0
        %v353 = vadd.f32 0.0, %v352
        %v354 = vpop.f32.mrf.mxu0
        %v355 = vadd.f32 0.0, %v354
        %356 = vdwg.mxu0
        %v357 = vadd.f32 %v282, %v284
        %v358 = vadd.f32 %v357, %v353
        %v359 = vadd.f32 %v358, %v355
        %360 = vadd.xlane.f32.xlu0 %v359
        %v361 = vpop.xlane.xlu0 %360
        %v362 = vmul.f32 %v282, %v282
        %v363 = vmul.f32 %v284, %v284
        %v364 = vmul.f32 %v353, %v353
        %v365 = vmul.f32 %v355, %v355
        %v366 = vadd.f32 %v362, %v363
        %v367 = vadd.f32 %v366, %v364
        %v368 = vadd.f32 %v367, %v365
        %369 = vadd.xlane.f32.xlu0 %v368
        %v370 = vpop.xlane.xlu0 %369
        %vm371 = vcmask 7168
        %v372 = vsel %vm371, %v361, %v370
        %vm373 = vcmask 15360
        %374 = vst.msk [vmem:[%s201] sm:$0xff] %vm373, %v372
        %p375 = scmp.lt.s32.totalorder %s21, 1
        %s376 = scalar_select %p375, %s21, 1
        %p377 = scmp.lt.s32.totalorder %s22, 1
        %s378 = scalar_select %p377, %s22, 1
        %s379 = smul.addr %s376, 2
        %s380 = sadd.s32 %s378, %s379
        %s381 = smul.addr %s380, 8
        %s382 = scalar_lea.vmem %s2, %s381
        // Predicated region
        $region37: #{tpu_custom_call.1} parent=27 // pred_check
          %p383 = pneg %p98
        $region38: #{tpu_custom_call.1} parent=27 // pred_check_branch
          %385 = sbr.rel (%p383) target = $region40
        $region39: #{tpu_custom_call.1} parent=27 // pred_region
          _
        $region40: #{tpu_custom_call.1} parent=27 // pred_fallthru
          _
      $region28: #{tpu_custom_call.1} parent=5 // pred_fallthru
        _
      %p386 = scmp.le.s32.totalorder 2, %s12
      // Predicated region
      $region41: #{tpu_custom_call.1} parent=5 // pred_check
        %p387 = pneg %p386
      $region42: #{tpu_custom_call.1} parent=5 // pred_check_branch
        %389 = sbr.rel (%p387) target = $region44
      $region43: #{tpu_custom_call.1} parent=5 // pred_region
        %s390 = ssub.s32 %s12, 2
        // Predicated region
        $region45: #{tpu_custom_call.1} parent=43 // pred_check
          %p391 = pneg %p104
        $region46: #{tpu_custom_call.1} parent=43 // pred_check_branch
          %393 = sbr.rel (%p391) target = $region48
        $region47: #{tpu_custom_call.1} parent=43 // pred_region
          %p394 = scmp.lt.s32.totalorder %s23, 1
          %s395 = scalar_select %p394, %s23, 1
          %p396 = scmp.lt.s32.totalorder %s24, 1
          %s397 = scalar_select %p396, %s24, 1
          %s398 = smul.addr %s395, 2
          %s399 = sadd.s32 %s397, %s398
          %s400 = smul.addr %s399, 8
          %s401 = scalar_lea.vmem %s2, %s400
        $region48: #{tpu_custom_call.1} parent=43 // pred_fallthru
          _
      $region44: #{tpu_custom_call.1} parent=5 // pred_fallthru
        _
    $region6: #{tpu_custom_call.1} parent=1 // loop_footer
      %s16 = sadd.s32 1, %s12
    $region7: #{tpu_custom_call.1} parent=1 // loop_footer_branch
      %11 = sbr.rel target = $region3
    $region8: #{tpu_custom_call.1} parent=1 // loop_exit
      _
    %402 = vsyncpa [#allocation3], 1
    %s403 = scalar_lea.sflag [#allocation3], 1
    %404 = vsyncpa %s403, 1
    %405 = vsyncpa [#allocation5], 1

</llo_original>
